<compile_context>
chip_gen: v6e
topology: v6e:2x2x1
jax: 0.10.0
libtpu: 0.0.40
codegen_flags: <defaults>
</compile_context>

<pallas_src>
import jax
import jax.numpy as jnp
from jax.experimental import pallas as pl
from jax.experimental.pallas import tpu as pltpu


def _make_convblock_kernel(kh, kw, wp, c, neg_slope=0.01):
    """Fused conv + bias + LeakyReLU for one 128-lane tile of the wide output."""
    taps = [(i, j) for i in range(kh) for j in range(kw)]

    def kernel(x0_ref, x1_ref, w_ref, b_ref, o_ref, xs_ref):
        # x0_ref : (C, SP_TILE)        lane tile t   of the flat padded image
        # x1_ref : (C, SP_TILE)        lane tile t+1 (overlap window for the taps)
        # w_ref  : (OC, KH*KW*C)       fused weight matrix (VMEM resident)
        # b_ref  : (OC, 1)             f32 bias column (VMEM resident)
        # o_ref  : (OC, SP_TILE)       one lane-dense tile of the wide output
        # xs_ref : (KH*KW*C, SP_TILE)  scratch: stacked shifted slabs
        sp_tile = o_ref.shape[-1]
        # 2*SP_TILE window of the flattened padded plane covering this tile.
        xw = jnp.concatenate([x0_ref[...], x1_ref[...]], axis=-1)     # (C, 2*SP_TILE)
        # Stack the KH*KW shifted slabs along sublanes (all offsets static).
        for t, (i, j) in enumerate(taps):
            d = i * wp + j
            xs_ref[pl.ds(t * c, c), :] = xw[:, d:d + sp_tile]
        # One MXU call: (OC, KH*KW*C) @ (KH*KW*C, SP_TILE), f32 accumulate.
        acc = jnp.dot(w_ref[...], xs_ref[...], preferred_element_type=jnp.float32)
        acc = acc + b_ref[...]                                         # bias (f32)
        out = jnp.where(acc >= 0, acc, jnp.float32(neg_slope) * acc)   # LeakyReLU
        o_ref[...] = out.astype(o_ref.dtype)

    return kernel


def conv_block(x, weight, bias, *, stride=1, padding=1,
               compute_dtype=jnp.bfloat16, sp_tile=128):
    """Conv2d(stride=1, padding) + LeakyReLU(0.01), NCHW in / NCHW out."""
    n, c, h, w = x.shape
    oc, cin, kh, kw = weight.shape
    assert cin == c
    # TODO(synk): stride > 1 / dilation / groups would need strided-lane
    # gathers; the ConvBlock configuration exercised here uses stride=1 only.
    assert stride == 1, "fused kernel implements the stride=1 ConvBlock config"
    ph = pw = int(padding)

    hp, wp = h + 2 * ph, w + 2 * pw
    oh, ow = hp - kh + 1, wp - kw + 1
    sp = oh * wp                              # wide spatial extent (incl. junk cols)
    delta_max = (kh - 1) * wp + (kw - 1)      # largest static tap offset

    # Each grid step consumes lanes [t*SP_TILE, t*SP_TILE + 2*SP_TILE) of the
    # flattened plane, so the tap window must fit inside two consecutive tiles.
    sp_tile = max(sp_tile, -(-delta_max // 128) * 128)
    if sp <= sp_tile:
        sp_tile = sp                          # tiny images: one full-width tile
    n_tiles = pl.cdiv(sp, sp_tile)

    # Backing lanes needed so tile n_tiles-1's "next" view stays in bounds.
    lanes_needed = (n_tiles + 1) * sp_tile
    extra_rows = -(-max(0, lanes_needed - hp * wp) // wp)
    hs = hp + extra_rows
    s_in = hs * wp

    # Single jnp.pad (spatial conv pad + bottom slack rows), then a free
    # contiguous reshape flattening H*W onto the lane axis.  NCHW is kept, so
    # there is no activation transpose and activations are read once.
    xp = jnp.pad(x, ((0, 0), (0, 0), (ph, ph + extra_rows), (pw, pw)))
    xf = xp.reshape(n, c, s_in).astype(compute_dtype)

    # Fused weight matrix: W2[oc, (i*KW + j)*C + cc] = weight[oc, cc, i, j].
    kc = kh * kw * c
    w2 = weight.transpose(0, 2, 3, 1).reshape(oc, kc).astype(compute_dtype)
    b_col = bias.reshape(oc, 1).astype(jnp.float32)

    kernel = _make_convblock_kernel(kh, kw, wp, c)

    itemsize = jnp.dtype(compute_dtype).itemsize
    flops = 2 * n * oc * kc * n_tiles * sp_tile
    bytes_accessed = (2 * n * c * n_tiles * sp_tile * itemsize   # two x views
                      + oc * kc * itemsize + 4 * oc
                      + 4 * n * oc * sp)

    out_wide = pl.pallas_call(
        kernel,
        out_shape=jax.ShapeDtypeStruct((n, oc, sp), x.dtype),
        grid_spec=pltpu.PrefetchScalarGridSpec(
            num_scalar_prefetch=0,
            grid=(n, n_tiles),            # N images x lane tiles -> >=3 steps/core on v7x
            in_specs=[
                # Two consecutive 128-lane views of the same flattened image:
                # keeps every tap offset static inside the kernel.
                pl.BlockSpec((None, c, sp_tile), lambda b, t: (b, 0, t)),
                pl.BlockSpec((None, c, sp_tile), lambda b, t: (b, 0, t + 1)),
                pl.BlockSpec((oc, kc), lambda b, t: (0, 0)),   # resident weights
                pl.BlockSpec((oc, 1), lambda b, t: (0, 0)),    # resident bias
            ],
            out_specs=pl.BlockSpec((None, oc, sp_tile), lambda b, t: (b, 0, t)),
            scratch_shapes=[pltpu.VMEM((kc, sp_tile), compute_dtype)],
        ),
        compiler_params=pltpu.CompilerParams(
            dimension_semantics=("parallel", "arbitrary"),
            vmem_limit_bytes=32 * 1024 * 1024),
        cost_estimate=pl.CostEstimate(
            flops=flops, transcendentals=0, bytes_accessed=bytes_accessed),
    )(xf, xf, w2, b_col)

    # (N, OC, OH*Wp) -> (N, OC, OH, OW): drop the junk columns.  Already NCHW.
    # TODO(synk): if the consumer accepts the wide (N, OC, OH, Wp) layout, skip
    # this slice (it is one extra strided HBM pass over the output).
    return out_wide.reshape(n, oc, oh, wp)[:, :, :, :ow]


if __name__ == "__main__":
    key = jax.random.PRNGKey(0)
    kx, kw_, kb = jax.random.split(key, 3)

    # ConvBlock(4, 8, kernel_size=3, stride=1, padding=1)
    N, C, H, W = 2, 4, 16, 16
    OC, KH, KW = 8, 3, 3

    x = jax.random.normal(kx, (N, C, H, W), dtype=jnp.float32)
    fan_in = C * KH * KW
    weight = jax.random.normal(kw_, (OC, C, KH, KW), dtype=jnp.float32) / jnp.sqrt(fan_in)
    bias = jax.random.normal(kb, (OC,), dtype=jnp.float32) * 0.1

    # Reference: XLA conv + bias + LeakyReLU(0.01).
    ref = jax.lax.conv_general_dilated(
        x, weight, window_strides=(1, 1), padding=((1, 1), (1, 1)),
        dimension_numbers=("NCHW", "OIHW", "NCHW"))
    ref = ref + bias.reshape(1, OC, 1, 1)
    ref = jnp.where(ref >= 0, ref, 0.01 * ref)

    # f32 path: faithful to the PyTorch module's forward numerics.
    out_f32 = jax.block_until_ready(
        conv_block(x, weight, bias, stride=1, padding=1,
                   compute_dtype=jnp.float32))
    assert out_f32.shape == (N, OC, H, W)
    assert jnp.allclose(out_f32, ref, atol=1e-3, rtol=1e-3)

    # bf16-input path (f32 accumulate): halved HBM read traffic, native MXU rate.
    out_bf16 = jax.block_until_ready(
        conv_block(x, weight, bias, stride=1, padding=1,
                   compute_dtype=jnp.bfloat16))
    assert out_bf16.shape == (N, OC, H, W)
    assert jnp.allclose(out_bf16, ref, atol=2e-2, rtol=2e-2)

    print("KERNEL_OK")
</pallas_src>

<mosaic_0001>
module attributes {stable_mosaic.version = 11 : i64} {
  func.func @kernel(%arg0: i32, %arg1: i32, %arg2: memref<1x4x128xf32, #tpu.memory_space<vmem>>, %arg3: memref<1x4x128xf32, #tpu.memory_space<vmem>>, %arg4: memref<8x36xf32, #tpu.memory_space<vmem>>, %arg5: memref<8x1xf32, #tpu.memory_space<vmem>>, %arg6: memref<1x8x128xf32, #tpu.memory_space<vmem>>, %arg7: memref<36x128xf32, #tpu.memory_space<vmem>>) attributes {dimension_semantics = [#tpu.dimension_semantics<parallel>, #tpu.dimension_semantics<arbitrary>], iteration_bounds = array<i64: 2, 3>, scalar_prefetch = 0 : i64, scratch_operands = 1 : i64, tpu.core_type = #tpu.core_type<tc>, window_params = [{transform_indices = @transform_0, window_bounds = array<i64: 1, 4, 128>}, {transform_indices = @transform_1, window_bounds = array<i64: 1, 4, 128>}, {pipeline_mode = #tpu.pipeline_mode<synchronous>, transform_indices = @transform_2, window_bounds = array<i64: 8, 36>}, {pipeline_mode = #tpu.pipeline_mode<synchronous>, transform_indices = @transform_3, window_bounds = array<i64: 8, 1>}, {transform_indices = @transform_4, window_bounds = array<i64: 1, 8, 128>}]} {
    %c0 = arith.constant 0 : index
    %c0_0 = arith.constant 0 : index
    %c0_1 = arith.constant 0 : index
    %0 = vector.load %arg2[%c0, %c0_0, %c0_1] : memref<1x4x128xf32, #tpu.memory_space<vmem>>, vector<1x4x128xf32>
    %1 = vector.shape_cast %0 : vector<1x4x128xf32> to vector<4x128xf32>
    %c0_2 = arith.constant 0 : index
    %c0_3 = arith.constant 0 : index
    %c0_4 = arith.constant 0 : index
    %2 = vector.load %arg3[%c0_2, %c0_3, %c0_4] : memref<1x4x128xf32, #tpu.memory_space<vmem>>, vector<1x4x128xf32>
    %3 = vector.shape_cast %2 : vector<1x4x128xf32> to vector<4x128xf32>
    %4 = tpu.concatenate %1, %3 in 1 : vector<4x128xf32>, vector<4x128xf32> -> vector<4x256xf32>
    %5 = vector.extract_strided_slice %4 {offsets = [0, 0], sizes = [4, 128], strides = [1, 1]} : vector<4x256xf32> to vector<4x128xf32>
    %c0_5 = arith.constant 0 : index
    %c0_6 = arith.constant 0 : index
    %6 = vector.load %arg7[%c0_5, %c0_6] : memref<36x128xf32, #tpu.memory_space<vmem>>, vector<4x128xf32>
    tpu.vector_store %arg7[%c0_5, %c0_6], %5 {strides = array<i32>} : memref<36x128xf32, #tpu.memory_space<vmem>>, vector<4x128xf32>,
    %7 = vector.extract_strided_slice %4 {offsets = [0, 1], sizes = [4, 128], strides = [1, 1]} : vector<4x256xf32> to vector<4x128xf32>
    %c4 = arith.constant 4 : index
    %c0_7 = arith.constant 0 : index
    %8 = vector.load %arg7[%c4, %c0_7] : memref<36x128xf32, #tpu.memory_space<vmem>>, vector<4x128xf32>
    tpu.vector_store %arg7[%c4, %c0_7], %7 {strides = array<i32>} : memref<36x128xf32, #tpu.memory_space<vmem>>, vector<4x128xf32>,
    %9 = vector.extract_strided_slice %4 {offsets = [0, 2], sizes = [4, 128], strides = [1, 1]} : vector<4x256xf32> to vector<4x128xf32>
    %c8 = arith.constant 8 : index
    %c0_8 = arith.constant 0 : index
    %10 = vector.load %arg7[%c8, %c0_8] : memref<36x128xf32, #tpu.memory_space<vmem>>, vector<4x128xf32>
    tpu.vector_store %arg7[%c8, %c0_8], %9 {strides = array<i32>} : memref<36x128xf32, #tpu.memory_space<vmem>>, vector<4x128xf32>,
    %11 = vector.extract_strided_slice %4 {offsets = [0, 18], sizes = [4, 128], strides = [1, 1]} : vector<4x256xf32> to vector<4x128xf32>
    %c12 = arith.constant 12 : index
    %c0_9 = arith.constant 0 : index
    %12 = vector.load %arg7[%c12, %c0_9] : memref<36x128xf32, #tpu.memory_space<vmem>>, vector<4x128xf32>
    tpu.vector_store %arg7[%c12, %c0_9], %11 {strides = array<i32>} : memref<36x128xf32, #tpu.memory_space<vmem>>, vector<4x128xf32>,
    %13 = vector.extract_strided_slice %4 {offsets = [0, 19], sizes = [4, 128], strides = [1, 1]} : vector<4x256xf32> to vector<4x128xf32>
    %c16 = arith.constant 16 : index
    %c0_10 = arith.constant 0 : index
    %14 = vector.load %arg7[%c16, %c0_10] : memref<36x128xf32, #tpu.memory_space<vmem>>, vector<4x128xf32>
    tpu.vector_store %arg7[%c16, %c0_10], %13 {strides = array<i32>} : memref<36x128xf32, #tpu.memory_space<vmem>>, vector<4x128xf32>,
    %15 = vector.extract_strided_slice %4 {offsets = [0, 20], sizes = [4, 128], strides = [1, 1]} : vector<4x256xf32> to vector<4x128xf32>
    %c20 = arith.constant 20 : index
    %c0_11 = arith.constant 0 : index
    %16 = vector.load %arg7[%c20, %c0_11] : memref<36x128xf32, #tpu.memory_space<vmem>>, vector<4x128xf32>
    tpu.vector_store %arg7[%c20, %c0_11], %15 {strides = array<i32>} : memref<36x128xf32, #tpu.memory_space<vmem>>, vector<4x128xf32>,
    %17 = vector.extract_strided_slice %4 {offsets = [0, 36], sizes = [4, 128], strides = [1, 1]} : vector<4x256xf32> to vector<4x128xf32>
    %c24 = arith.constant 24 : index
    %c0_12 = arith.constant 0 : index
    %18 = vector.load %arg7[%c24, %c0_12] : memref<36x128xf32, #tpu.memory_space<vmem>>, vector<4x128xf32>
    tpu.vector_store %arg7[%c24, %c0_12], %17 {strides = array<i32>} : memref<36x128xf32, #tpu.memory_space<vmem>>, vector<4x128xf32>,
    %19 = vector.extract_strided_slice %4 {offsets = [0, 37], sizes = [4, 128], strides = [1, 1]} : vector<4x256xf32> to vector<4x128xf32>
    %c28 = arith.constant 28 : index
    %c0_13 = arith.constant 0 : index
    %20 = vector.load %arg7[%c28, %c0_13] : memref<36x128xf32, #tpu.memory_space<vmem>>, vector<4x128xf32>
    tpu.vector_store %arg7[%c28, %c0_13], %19 {strides = array<i32>} : memref<36x128xf32, #tpu.memory_space<vmem>>, vector<4x128xf32>,
    %21 = vector.extract_strided_slice %4 {offsets = [0, 38], sizes = [4, 128], strides = [1, 1]} : vector<4x256xf32> to vector<4x128xf32>
    %c32 = arith.constant 32 : index
    %c0_14 = arith.constant 0 : index
    %22 = vector.load %arg7[%c32, %c0_14] : memref<36x128xf32, #tpu.memory_space<vmem>>, vector<4x128xf32>
    tpu.vector_store %arg7[%c32, %c0_14], %21 {strides = array<i32>} : memref<36x128xf32, #tpu.memory_space<vmem>>, vector<4x128xf32>,
    %c0_15 = arith.constant 0 : index
    %c0_16 = arith.constant 0 : index
    %23 = vector.load %arg4[%c0_15, %c0_16] : memref<8x36xf32, #tpu.memory_space<vmem>>, vector<8x36xf32>
    %c0_17 = arith.constant 0 : index
    %c0_18 = arith.constant 0 : index
    %24 = vector.load %arg7[%c0_17, %c0_18] : memref<36x128xf32, #tpu.memory_space<vmem>>, vector<36x128xf32>
    %cst = arith.constant dense<0.000000e+00> : vector<8x128xf32>
    %25 = tpu.matmul %23, %24, %cst {dimension_numbers = #tpu.dot_dimension_numbers<[1], [0], [0], [1], [0, 0, 1, 1], [], []>} : vector<8x36xf32>, vector<36x128xf32>, vector<8x128xf32> -> vector<8x128xf32>
    %c0_19 = arith.constant 0 : index
    %c0_20 = arith.constant 0 : index
    %26 = vector.load %arg5[%c0_19, %c0_20] : memref<8x1xf32, #tpu.memory_space<vmem>>, vector<8x1xf32>
    %27 = vector.broadcast %26 : vector<8x1xf32> to vector<8x128xf32>
    %28 = arith.addf %25, %27 : vector<8x128xf32>
    %cst_21 = arith.constant 0.000000e+00 : f32
    %29 = vector.broadcast %cst_21 : f32 to vector<8x128xf32>
    %30 = arith.cmpf oge, %28, %29 : vector<8x128xf32>
    %cst_22 = arith.constant 0.00999999977 : f32
    %31 = vector.broadcast %cst_22 : f32 to vector<8x128xf32>
    %32 = arith.mulf %31, %28 : vector<8x128xf32>
    %33 = arith.select %30, %28, %32 : vector<8x128xi1>, vector<8x128xf32>
    %c0_23 = arith.constant 0 : index
    %c0_24 = arith.constant 0 : index
    %c0_25 = arith.constant 0 : index
    %34 = vector.load %arg6[%c0_23, %c0_24, %c0_25] : memref<1x8x128xf32, #tpu.memory_space<vmem>>, vector<1x8x128xf32>
    %35 = vector.shape_cast %34 : vector<1x8x128xf32> to vector<8x128xf32>
    %36 = vector.shape_cast %33 : vector<8x128xf32> to vector<1x8x128xf32>
    tpu.vector_store %arg6[%c0_23, %c0_24, %c0_25], %36 {strides = array<i32>} : memref<1x8x128xf32, #tpu.memory_space<vmem>>, vector<1x8x128xf32>,
    return
  }
  func.func @transform_0(%arg0: i32, %arg1: i32) -> (i32, i32, i32) {
    %c0_i32 = arith.constant 0 : i32
    %c0_i32_0 = arith.constant 0 : i32
    return %arg0, %c0_i32, %arg1 : i32, i32, i32
  }
  func.func @transform_1(%arg0: i32, %arg1: i32) -> (i32, i32, i32) {
    %c1_i32 = arith.constant 1 : i32
    %0 = arith.addi %arg1, %c1_i32 : i32
    %c0_i32 = arith.constant 0 : i32
    %c0_i32_0 = arith.constant 0 : i32
    return %arg0, %c0_i32, %0 : i32, i32, i32
  }
  func.func @transform_2(%arg0: i32, %arg1: i32) -> (i32, i32) {
    %c0_i32 = arith.constant 0 : i32
    %c0_i32_0 = arith.constant 0 : i32
    %c0_i32_1 = arith.constant 0 : i32
    return %c0_i32, %c0_i32_0 : i32, i32
  }
  func.func @transform_3(%arg0: i32, %arg1: i32) -> (i32, i32) {
    %c0_i32 = arith.constant 0 : i32
    %c0_i32_0 = arith.constant 0 : i32
    %c0_i32_1 = arith.constant 0 : i32
    return %c0_i32, %c0_i32_0 : i32, i32
  }
  func.func @transform_4(%arg0: i32, %arg1: i32) -> (i32, i32, i32) {
    %c0_i32 = arith.constant 0 : i32
    %c0_i32_0 = arith.constant 0 : i32
    return %arg0, %c0_i32, %arg1 : i32, i32, i32
  }
}

</mosaic_0001>

<llo_original>
// kernel: tpu_custom_call.1
$region0: #{tpu_custom_call.1}
  #allocation0 [shape = 'u32[]', space=smem, size = 0x4, offset = 0x4, fixed_abs, tag = 'smem constant byte address 0x4 - core index']
  #allocation1 [shape = 'u32[144,128]{1,0:T(1,128)}', space=vmem, size = 0x12000, scoped, tag = 'internal scratch']
  #allocation2 [shape = 'f32[36,128]{1,0:T(8,128)}', space=vmem, size = 0x5000, scoped, tag = 'scratch operand']
  %s0 = inlined_call_operand.hbm [shape: f32[2,4,522], index: 0, kind: input, shape index: {}]
  %s1 = inlined_call_operand.hbm [shape: f32[2,4,522], index: 1, kind: input, shape index: {}]
  %s2 = inlined_call_operand.vmem [shape: f32[8,36], index: 2, kind: input, shape index: {}]
  %s3 = inlined_call_operand.vmem [shape: f32[8,1], index: 3, kind: input, shape index: {}]
  %s4 = inlined_call_operand.hbm [shape: f32[2,8,288], index: 4, kind: output, shape index: {}]
  %s5 = sld [smem:[#allocation0]]
  $region57: #{tpu_custom_call.1} parent=0
    _
  %s7 = ssub.s32 1, %s5
  %s8 = scalar_select 0, %s7, %s5
  $region1: #{tpu_custom_call.1} parent=0
    #allocation3 [shape = 'u8[4096]{0}', space=vmem, size = 0x1000, scoped, tag = 'input window, operand 0']
    #allocation4 [shape = 's32[2]{0}', space=sflag, size = 0x8, scoped, tag = 'scoped memory for tpu_custom_call.1']
    #allocation5 [shape = 's32[2]{0}', space=sflag, size = 0x8, scoped, tag = 'scoped memory for tpu_custom_call.1']
    #allocation6 [shape = 'u8[4096]{0}', space=vmem, size = 0x1000, scoped, tag = 'input window, operand 1']
    #allocation7 [shape = 's32[2]{0}', space=sflag, size = 0x8, scoped, tag = 'scoped memory for tpu_custom_call.1']
    #allocation8 [shape = 'u8[8192]{0}', space=vmem, size = 0x2000, scoped, tag = 'output window, operand 0']
    %9 = vsyncpa [#allocation4], 0
    %s10 = scalar_lea.sflag [#allocation4], 1
    %11 = vsyncpa %s10, 0
    %12 = vsyncpa [#allocation7], 0
    %s13 = scalar_lea.sflag [#allocation7], 1
    %14 = vsyncpa %s13, 0
    %15 = vsyncpa [#allocation5], 0
    %s16 = scalar_lea.sflag [#allocation5], 1
    %17 = vsyncpa %s16, 0
    loop: start=0, step=1, limit=8
    $region2: #{tpu_custom_call.1} parent=1 // loop_pre_header
      _
    $region3: #{tpu_custom_call.1} parent=1 // loop_header
      %s19 = sphi 0, %s23
      %p20 = scmp.ge.s32.totalorder %s19, 8
      %s26 = sphi 0, %s38
      %s27 = sphi 0, %s34
      %s28 = sphi 0, %s26
      %s29 = sphi 0, %s27
      %s30 = sphi 0, %s28
      %s31 = sphi 0, %s29
      %s43 = sphi 0, %s45
      %s46 = sphi 0, %s43
      %s47 = sphi 0, %s46
      %s63 = sphi 0, %s47
      %s73 = sphi 0, %s75
      %s76 = sphi 0, %s73
      %s77 = sphi 0, %s76
      %s93 = sphi 0, %s77
      %s97 = sphi 0, %s97
      %s99 = sphi 0, %s97
      %s100 = sphi 0, %s99
      %s114 = sphi 0, %s100
      %s118 = sphi 0, %s118
      %s120 = sphi 0, %s118
      %s121 = sphi 0, %s120
      %s135 = sphi 0, %s121
      %s143 = sphi 0, %s145
      %s146 = sphi 0, %s143
      %s147 = sphi 0, %s146
      %s163 = sphi 0, %s147
    $region4: #{tpu_custom_call.1} parent=1 // loop_header_branch
      %22 = sbr.rel (%p20) target = $region8
    $region5: #{tpu_custom_call.1} parent=1 // loop_body
      %s24 = ssub.s32 %s19, 1
      %s25 = ssub.s32 %s19, 2
      %s32 = sadd.s32 1, %s27
      %p33 = scmp.ge.s32.totalorder %s32, 3
      %s34 = scalar_select %p33, 0, %s32
      %s35 = sadd.s32 1, %s26
      %s36 = scalar_select %p33, %s35, %s26
      %p37 = scmp.ge.s32.totalorder %s36, 2
      %s38 = scalar_select %p37, 0, %s36
      %s39 = ssub.s32 %s26, %s38
      %s40 = ssub.s32 %s27, %s34
      %s41 = sor.u32 %s39, %s40
      %p42 = scmp.eq.s32.totalorder %s41, 0
      %s44 = sadd.s32 %s43, 1
      %s45 = scalar_select %p42, %s43, %s44
      %p48 = pneg %p42
      %p49 = scmp.eq.s32.totalorder %s19, 5
      %p50 = por %p48, %p49
      %p51 = scmp.ne.s32.totalorder %s43, %s46
      %p52 = scmp.eq.s32.totalorder %s19, 0
      %p53 = por %p51, %p52
      %p54 = scmp.ne.s32.totalorder %s43, %s46
      %p55 = scmp.eq.s32.totalorder %s24, 5
      %p56 = por %p54, %p55
      %p57 = scmp.ne.s32.totalorder %s46, %s47
      %p58 = scmp.eq.s32.totalorder %s24, 0
      %p59 = por %p57, %p58
      %p60 = scmp.ne.s32.totalorder %s46, %s47
      %p61 = scmp.eq.s32.totalorder %s25, 5
      %p62 = por %p60, %p61
      %p64 = scmp.ne.s32.totalorder %s47, %s63
      %p65 = scmp.eq.s32.totalorder %s25, 0
      %p66 = por %p64, %p65
      %s67 = sadd.s32 %s27, 1
      %s68 = sadd.s32 %s34, 1
      %s69 = ssub.s32 %s26, %s38
      %s70 = ssub.s32 %s67, %s68
      %s71 = sor.u32 %s69, %s70
      %p72 = scmp.eq.s32.totalorder %s71, 0
      %s74 = sadd.s32 %s73, 1
      %s75 = scalar_select %p72, %s73, %s74
      %p78 = pneg %p72
      %p79 = scmp.eq.s32.totalorder %s19, 5
      %p80 = por %p78, %p79
      %p81 = scmp.ne.s32.totalorder %s73, %s76
      %p82 = scmp.eq.s32.totalorder %s19, 0
      %p83 = por %p81, %p82
      %p84 = scmp.ne.s32.totalorder %s73, %s76
      %p85 = scmp.eq.s32.totalorder %s24, 5
      %p86 = por %p84, %p85
      %p87 = scmp.ne.s32.totalorder %s76, %s77
      %p88 = scmp.eq.s32.totalorder %s24, 0
      %p89 = por %p87, %p88
      %p90 = scmp.ne.s32.totalorder %s76, %s77
      %p91 = scmp.eq.s32.totalorder %s25, 5
      %p92 = por %p90, %p91
      %p94 = scmp.ne.s32.totalorder %s77, %s93
      %p95 = scmp.eq.s32.totalorder %s25, 0
      %p96 = por %p94, %p95
      %s98 = sadd.s32 %s97, 1
      %p101 = scmp.eq.s32.totalorder %s19, 5
      %p102 = scmp.ne.s32.totalorder %s97, %s99
      %p103 = scmp.eq.s32.totalorder %s19, 0
      %p104 = por %p102, %p103
      %p105 = scmp.ne.s32.totalorder %s97, %s99
      %p106 = scmp.eq.s32.totalorder %s24, 5
      %p107 = por %p105, %p106
      %p108 = scmp.ne.s32.totalorder %s99, %s100
      %p109 = scmp.eq.s32.totalorder %s24, 0
      %p110 = por %p108, %p109
      %p111 = scmp.ne.s32.totalorder %s99, %s100
      %p112 = scmp.eq.s32.totalorder %s25, 5
      %p113 = por %p111, %p112
      %p115 = scmp.ne.s32.totalorder %s100, %s114
      %p116 = scmp.eq.s32.totalorder %s25, 0
      %p117 = por %p115, %p116
      %s119 = sadd.s32 %s118, 1
      %p122 = scmp.eq.s32.totalorder %s19, 5
      %p123 = scmp.ne.s32.totalorder %s118, %s120
      %p124 = scmp.eq.s32.totalorder %s19, 0
      %p125 = por %p123, %p124
      %p126 = scmp.ne.s32.totalorder %s118, %s120
      %p127 = scmp.eq.s32.totalorder %s24, 5
      %p128 = por %p126, %p127
      %p129 = scmp.ne.s32.totalorder %s120, %s121
      %p130 = scmp.eq.s32.totalorder %s24, 0
      %p131 = por %p129, %p130
      %p132 = scmp.ne.s32.totalorder %s120, %s121
      %p133 = scmp.eq.s32.totalorder %s25, 5
      %p134 = por %p132, %p133
      %p136 = scmp.ne.s32.totalorder %s121, %s135
      %p137 = scmp.eq.s32.totalorder %s25, 0
      %p138 = por %p136, %p137
      %s139 = ssub.s32 %s26, %s38
      %s140 = ssub.s32 %s27, %s34
      %s141 = sor.u32 %s139, %s140
      %p142 = scmp.eq.s32.totalorder %s141, 0
      %s144 = sadd.s32 %s143, 1
      %s145 = scalar_select %p142, %s143, %s144
      %p148 = pneg %p142
      %p149 = scmp.eq.s32.totalorder %s19, 5
      %p150 = por %p148, %p149
      %p151 = scmp.ne.s32.totalorder %s143, %s146
      %p152 = scmp.eq.s32.totalorder %s19, 0
      %p153 = por %p151, %p152
      %p154 = scmp.ne.s32.totalorder %s143, %s146
      %p155 = scmp.eq.s32.totalorder %s24, 5
      %p156 = por %p154, %p155
      %p157 = scmp.ne.s32.totalorder %s146, %s147
      %p158 = scmp.eq.s32.totalorder %s24, 0
      %p159 = por %p157, %p158
      %p160 = scmp.ne.s32.totalorder %s146, %s147
      %p161 = scmp.eq.s32.totalorder %s25, 5
      %p162 = por %p160, %p161
      %p164 = scmp.ne.s32.totalorder %s147, %s163
      %p165 = scmp.eq.s32.totalorder %s25, 0
      %p166 = por %p164, %p165
      %p167 = scmp.le.s32.totalorder 1, %s19
      %p168 = scmp.lt.s32.totalorder %s19, 7
      %p169 = pnand %p167, %p168
      %p170 = pneg %p169
      // Predicated region
      $region9: #{tpu_custom_call.1} parent=5 // pred_check
        _
      $region10: #{tpu_custom_call.1} parent=5 // pred_check_branch
        %172 = sbr.rel (%p169) target = $region12
      $region11: #{tpu_custom_call.1} parent=5 // pred_region
        %s173 = ssub.s32 %s19, 1
        // Predicated region
        $region13: #{tpu_custom_call.1} parent=11 // pred_check
          %p174 = pneg %p110
        $region14: #{tpu_custom_call.1} parent=11 // pred_check_branch
          %176 = sbr.rel (%p174) target = $region16
        $region15: #{tpu_custom_call.1} parent=11 // pred_region
          _
        $region16: #{tpu_custom_call.1} parent=11 // pred_fallthru
          _
        // Predicated region
        $region17: #{tpu_custom_call.1} parent=11 // pred_check
          %p177 = pneg %p131
        $region18: #{tpu_custom_call.1} parent=11 // pred_check_branch
          %179 = sbr.rel (%p177) target = $region20
        $region19: #{tpu_custom_call.1} parent=11 // pred_region
          _
        $region20: #{tpu_custom_call.1} parent=11 // pred_fallthru
          _
      $region12: #{tpu_custom_call.1} parent=5 // pred_fallthru
        _
      %p180 = scmp.lt.s32.totalorder %s19, 6
      // Predicated region
      $region21: #{tpu_custom_call.1} parent=5 // pred_check
        %p181 = pneg %p180
      $region22: #{tpu_custom_call.1} parent=5 // pred_check_branch
        %183 = sbr.rel (%p181) target = $region24
      $region23: #{tpu_custom_call.1} parent=5 // pred_region
        // Predicated region
        $region25: #{tpu_custom_call.1} parent=23 // pred_check
          %p184 = pneg %p53
        $region26: #{tpu_custom_call.1} parent=23 // pred_check_branch
          %186 = sbr.rel (%p184) target = $region28
        $region27: #{tpu_custom_call.1} parent=23 // pred_region
          %s187 = sand.u32 %s43, 1
          %s188 = scalar_lea.sflag [#allocation4], %s187
          %s189 = sand.u32 %s43, 1
          %s190 = smul.addr %s189, 4
          %s191 = scalar_lea.vmem [#allocation3], %s190
          %s193 = ssub.s32 64, 64
          %194 = vsyncadd %s188, %s193
          %s195 = smul.addr %s26, 5
          %s196 = sadd.s32 %s27, %s195
          %s197 = smul.addr %s196, 64
          %s198 = scalar_lea.hbm %s0, %s197
          %s200 = sshll.u32 %s191, 4
          %s201 = int_to_ptr.vmem [resolvable:$true] %s200
          %203 = dma.hbm_to_vmem [thread:$0]  %s198, 64, %s201, %s188
        $region28: #{tpu_custom_call.1} parent=23 // pred_fallthru
          _
        // Predicated region
        $region29: #{tpu_custom_call.1} parent=23 // pred_check
          %p204 = pneg %p83
        $region30: #{tpu_custom_call.1} parent=23 // pred_check_branch
          %206 = sbr.rel (%p204) target = $region32
        $region31: #{tpu_custom_call.1} parent=23 // pred_region
          %s207 = sand.u32 %s73, 1
          %s208 = scalar_lea.sflag [#allocation7], %s207
          %s209 = sand.u32 %s73, 1
          %s210 = smul.addr %s209, 4
          %s211 = scalar_lea.vmem [#allocation6], %s210
          %s212 = sadd.s32 %s27, 1
          %s214 = ssub.s32 64, 64
          %215 = vsyncadd %s208, %s214
          %s216 = smul.addr %s26, 5
          %s217 = sadd.s32 %s212, %s216
          %s218 = smul.addr %s217, 64
          %s219 = scalar_lea.hbm %s1, %s218
          %s221 = sshll.u32 %s211, 4
          %s222 = int_to_ptr.vmem [resolvable:$true] %s221
          %224 = dma.hbm_to_vmem [thread:$0]  %s219, 64, %s222, %s208
        $region32: #{tpu_custom_call.1} parent=23 // pred_fallthru
          _
      $region24: #{tpu_custom_call.1} parent=5 // pred_fallthru
        _
      %p225 = scmp.le.s32.totalorder 1, %s19
      %p226 = scmp.lt.s32.totalorder %s19, 7
      %p227 = pnand %p225, %p226
      %p228 = pneg %p227
      // Predicated region
      $region33: #{tpu_custom_call.1} parent=5 // pred_check
        _
      $region34: #{tpu_custom_call.1} parent=5 // pred_check_branch
        %230 = sbr.rel (%p227) target = $region36
      $region35: #{tpu_custom_call.1} parent=5 // pred_region
        %s231 = ssub.s32 %s19, 1
        %s232 = sand.u32 %s46, 1
        %s233 = scalar_lea.sflag [#allocation4], %s232
        %s234 = sand.u32 %s46, 1
        %s235 = smul.addr %s234, 4
        %s236 = scalar_lea.vmem [#allocation3], %s235
        // Predicated region
        $region37: #{tpu_custom_call.1} parent=35 // pred_check
          %p237 = pneg %p59
        $region38: #{tpu_custom_call.1} parent=35 // pred_check_branch
          %239 = sbr.rel (%p237) target = $region40
        $region39: #{tpu_custom_call.1} parent=35 // pred_region
          %240 = dma.done %s233, 64
        $region40: #{tpu_custom_call.1} parent=35 // pred_fallthru
          _
        %s241 = sand.u32 %s76, 1
        %s242 = scalar_lea.sflag [#allocation7], %s241
        %s243 = sand.u32 %s76, 1
        %s244 = smul.addr %s243, 4
        %s245 = scalar_lea.vmem [#allocation6], %s244
        // Predicated region
        $region41: #{tpu_custom_call.1} parent=35 // pred_check
          %p246 = pneg %p89
        $region42: #{tpu_custom_call.1} parent=35 // pred_check_branch
          %248 = sbr.rel (%p246) target = $region44
        $region43: #{tpu_custom_call.1} parent=35 // pred_region
          %249 = dma.done %s242, 64
        $region44: #{tpu_custom_call.1} parent=35 // pred_fallthru
          _
        %s250 = sand.u32 %s46, 1
        %s251 = scalar_lea.sflag [#allocation4], %s250
        %s252 = sand.u32 %s46, 1
        %s253 = smul.addr %s252, 4
        %s254 = scalar_lea.vmem [#allocation3], %s253
        %p255 = pneg %p59
        %p256 = pneg %p56
        %s257 = sand.u32 %s76, 1
        %s258 = scalar_lea.sflag [#allocation7], %s257
        %s259 = sand.u32 %s76, 1
        %s260 = smul.addr %s259, 4
        %s261 = scalar_lea.vmem [#allocation6], %s260
        %p262 = pneg %p89
        %p263 = pneg %p86
        %p264 = pneg %p110
        %p265 = pneg %p107
        %p266 = pneg %p131
        %p267 = pneg %p128
        %p268 = pneg %p159
        %p269 = pneg %p156
        %s270 = sand.u32 %s146, 1
        %s271 = scalar_lea.sflag [#allocation5], %s270
        %s272 = sand.u32 %s146, 1
        %s273 = smul.addr %s272, 8
        %s274 = scalar_lea.vmem [#allocation8], %s273
        %s275 = sadd.s32 %s29, 1
        %v276 = vld [vmem:[%s236] sm:$0xf]
        %v277 = vld [vmem:[%s245] sm:$0xf]
        %278 = vst [vmem:[#allocation2] sm:$0xf] %v276
        %281 = vrot.lane.b32.xlu0 %v276, 127
        %v282 = vpop.permute.xlu0 %281
        %283 = vrot.lane.b32.xlu0 %v277, 127
        %v284 = vpop.permute.xlu0 %283
        %vm285 = vcmask 1039360
        %v286 = vsel %vm285, %v282, %v284
        %288 = vst [vmem:[#allocation2 + $0x4] sm:$0xf] %v286
        %289 = vrot.lane.b32.xlu0 %v276, 126
        %v290 = vpop.permute.xlu0 %289
        %291 = vrot.lane.b32.xlu0 %v277, 126
        %v292 = vpop.permute.xlu0 %291
        %vm293 = vcmask 1031168
        %v294 = vsel %vm293, %v290, %v292
        %296 = vst [vmem:[#allocation2 + $0x8] sm:$0xf] %v294
        %297 = vrot.lane.b32.xlu0 %v276, 110
        %v298 = vpop.permute.xlu0 %297
        %299 = vrot.lane.b32.xlu0 %v277, 110
        %v300 = vpop.permute.xlu0 %299
        %vm301 = vcmask 900096
        %v302 = vsel %vm301, %v298, %v300
        %304 = vst [vmem:[#allocation2 + $0xc] sm:$0xf] %v302
        %305 = vrot.lane.b32.xlu0 %v276, 109
        %v306 = vpop.permute.xlu0 %305
        %307 = vrot.lane.b32.xlu0 %v277, 109
        %v308 = vpop.permute.xlu0 %307
        %vm309 = vcmask 891904
        %v310 = vsel %vm309, %v306, %v308
        %312 = vst [vmem:[#allocation2 + $0x10] sm:$0xf] %v310
        %313 = vrot.lane.b32.xlu0 %v276, 108
        %v314 = vpop.permute.xlu0 %313
        %315 = vrot.lane.b32.xlu0 %v277, 108
        %v316 = vpop.permute.xlu0 %315
        %vm317 = vcmask 883712
        %v318 = vsel %vm317, %v314, %v316
        %320 = vst [vmem:[#allocation2 + $0x14] sm:$0xf] %v318
        %321 = vrot.lane.b32.xlu0 %v276, 92
        %v322 = vpop.permute.xlu0 %321
        %323 = vrot.lane.b32.xlu0 %v277, 92
        %v324 = vpop.permute.xlu0 %323
        %vm325 = vcmask 752640
        %v326 = vsel %vm325, %v322, %v324
        %328 = vst [vmem:[#allocation2 + $0x18] sm:$0xf] %v326
        %329 = vrot.lane.b32.xlu0 %v276, 91
        %v330 = vpop.permute.xlu0 %329
        %331 = vrot.lane.b32.xlu0 %v277, 91
        %v332 = vpop.permute.xlu0 %331
        %vm333 = vcmask 744448
        %v334 = vsel %vm333, %v330, %v332
        %336 = vst [vmem:[#allocation2 + $0x1c] sm:$0xf] %v334
        %337 = vrot.lane.b32.xlu0 %v276, 90
        %v338 = vpop.permute.xlu0 %337
        %339 = vrot.lane.b32.xlu0 %v277, 90
        %v340 = vpop.permute.xlu0 %339
        %vm341 = vcmask 736256
        %v342 = vsel %vm341, %v338, %v340
        %344 = vst [vmem:[#allocation2 + $0x20] sm:$0xf] %v342
        %v345 = vld [vmem:[%s2] sm:$0xff]
        %v346 = vld [vmem:[#allocation2] sm:$0xff]
        %v347 = vld [vmem:[#allocation2 + $0x8] sm:$0xff]
        %v348 = vld [vmem:[#allocation2 + $0x10] sm:$0xff]
        %v349 = vld [vmem:[#allocation2 + $0x18] sm:$0xff]
        %v350 = vld [vmem:[#allocation2 + $0x20] sm:$0xf]
        %v351 = vld [vmem:[%s3] sm:$0xff]
        %353 = vset.pattern.permute.xlu0 0
        %354 = vperm.xlu0 %353, %v351
        %v355 = vpop.permute.xlu0 %354
        %vm357 = vcmask 293888
        %v359 = vsel %vm357, %v345, 0
        %vm361 = vcmask 1043456
        %v363 = vsel %vm361, %v350, 0
        %365 = vmatprep.subr.mxu0 0.0
        %366 = vmatpush1.msra.mxu0 0.0
        %367 = vmatprep.subr.mxu0 0.0
        %368 = vmatpush1.msra.mxu0 0.0
        %369 = vmatprep.subr.mxu0 0.0
        %370 = vmatpush1.msra.mxu0 0.0
        %371 = vmatprep.subr.mxu0 0.0
        %372 = vmatpush1.msra.mxu0 0.0
        %373 = vmatprep.subr.mxu0 0.0
        %374 = vmatpush1.msra.mxu0 0.0
        %375 = vmatprep.subr.mxu0 0.0
        %376 = vmatpush1.msra.mxu0 0.0
        %377 = vmatprep.subr.mxu0 0.0
        %378 = vmatpush1.msra.mxu0 0.0
        %379 = vmatprep.subr.mxu0 0.0
        %380 = vmatpush1.msra.mxu0 0.0
        %381 = vmatprep.subr.mxu0 0.0
        %382 = vmatpush1.msra.mxu0 0.0
        %383 = vmatprep.subr.mxu0 0.0
        %384 = vmatpush1.msra.mxu0 0.0
        %385 = vmatprep.subr.mxu0 0.0
        %386 = vmatpush1.msra.mxu0 0.0
        %387 = vmatprep.subr.mxu0 0.0
        %388 = vmatpush1.msra.mxu0 %v363
        %389 = vmatprep.subr.mxu0 0.0
        %390 = vmatpush1.msra.mxu0 %v349
        %391 = vmatprep.subr.mxu0 0.0
        %392 = vmatpush1.msra.mxu0 %v348
        %393 = vmatprep.subr.mxu0 0.0
        %394 = vmatpush1.msra.mxu0 %v347
        %395 = vmatprep.subr.mxu0 0.0
        %396 = vmatpush1.msra.mxu0 %v346
        %397 = vmatprep.subr.mxu0 0.0
        %398 = vmatpush2.msra.mxu0 0.0
        %399 = vmatprep.subr.mxu0 0.0
        %400 = vmatpush2.msra.mxu0 0.0
        %401 = vmatprep.subr.mxu0 0.0
        %402 = vmatpush2.msra.mxu0 0.0
        %403 = vmatprep.subr.mxu0 0.0
        %404 = vmatpush2.msra.mxu0 0.0
        %405 = vmatprep.subr.mxu0 0.0
        %406 = vmatpush2.msra.mxu0 0.0
        %407 = vmatprep.subr.mxu0 0.0
        %408 = vmatpush2.msra.mxu0 0.0
        %409 = vmatprep.subr.mxu0 0.0
        %410 = vmatpush2.msra.mxu0 0.0
        %411 = vmatprep.subr.mxu0 0.0
        %412 = vmatpush2.msra.mxu0 0.0
        %413 = vmatprep.subr.mxu0 0.0
        %414 = vmatpush2.msra.mxu0 0.0
        %415 = vmatprep.subr.mxu0 0.0
        %416 = vmatpush2.msra.mxu0 0.0
        %417 = vmatprep.subr.mxu0 0.0
        %418 = vmatpush2.msra.mxu0 0.0
        %419 = vmatprep.subr.mxu0 0.0
        %420 = vmatpush2.msra.mxu0 0.0
        %421 = vmatprep.subr.mxu0 0.0
        %422 = vmatpush2.msra.mxu0 0.0
        %423 = vmatprep.subr.mxu0 0.0
        %424 = vmatpush2.msra.mxu0 0.0
        %425 = vmatprep.subr.mxu0 0.0
        %426 = vmatpush2.msra.mxu0 0.0
        %427 = vmatprep.subr.mxu0 0.0
        %428 = vmatpush2.msra.mxu0 0.0
        %429 = vmatprep.mubr.f32.mxu0 0.0
        %430 = vmatmul.mubr.f32.gmra.mxu0 %v359
        %v431 = vpop.f32.mrf.mxu0
        %v432 = vadd.f32 %v355, %v431
        %v433 = vpop.f32.mrf.mxu0
        %434 = vdwg.mxu0
        %vm435 = vcmp.ge.f32.partialorder %v432, 0.0
        %v436 = vmul.f32 %v432, 0.01
        %v437 = vsel %vm435, %v432, %v436
        %438 = vst [vmem:[%s274] sm:$0xff] %v437
        %s439 = sand.u32 %s146, 1
        %s440 = scalar_lea.sflag [#allocation5], %s439
        %s441 = sand.u32 %s146, 1
        %s442 = smul.addr %s441, 8
        %s443 = scalar_lea.vmem [#allocation8], %s442
        // Predicated region
        $region45: #{tpu_custom_call.1} parent=35 // pred_check
          %p444 = pneg %p156
        $region46: #{tpu_custom_call.1} parent=35 // pred_check_branch
          %446 = sbr.rel (%p444) target = $region48
        $region47: #{tpu_custom_call.1} parent=35 // pred_region
          %s448 = ssub.s32 128, 128
          %449 = vsyncadd %s440, %s448
          %s450 = smul.addr %s28, 3
          %s451 = sadd.s32 %s29, %s450
          %s452 = smul.addr %s451, 128
          %s453 = scalar_lea.hbm %s4, %s452
          %s455 = sshll.u32 %s443, 4
          %s456 = int_to_ptr.vmem [resolvable:$true] %s455
          %458 = dma.vmem_to_hbm [thread:$0]  %s456, 128, %s453, %s440
        $region48: #{tpu_custom_call.1} parent=35 // pred_fallthru
          _
      $region36: #{tpu_custom_call.1} parent=5 // pred_fallthru
        _
      %p459 = scmp.le.s32.totalorder 2, %s19
      // Predicated region
      $region49: #{tpu_custom_call.1} parent=5 // pred_check
        %p460 = pneg %p459
      $region50: #{tpu_custom_call.1} parent=5 // pred_check_branch
        %462 = sbr.rel (%p460) target = $region52
      $region51: #{tpu_custom_call.1} parent=5 // pred_region
        %s463 = ssub.s32 %s19, 2
        // Predicated region
        $region53: #{tpu_custom_call.1} parent=51 // pred_check
          %p464 = pneg %p162
        $region54: #{tpu_custom_call.1} parent=51 // pred_check_branch
          %466 = sbr.rel (%p464) target = $region56
        $region55: #{tpu_custom_call.1} parent=51 // pred_region
          %s467 = sand.u32 %s147, 1
          %s468 = scalar_lea.sflag [#allocation5], %s467
          %s469 = sand.u32 %s147, 1
          %s470 = smul.addr %s469, 8
          %s471 = scalar_lea.vmem [#allocation8], %s470
          %472 = dma.done %s468, 128
        $region56: #{tpu_custom_call.1} parent=51 // pred_fallthru
          _
      $region52: #{tpu_custom_call.1} parent=5 // pred_fallthru
        _
    $region6: #{tpu_custom_call.1} parent=1 // loop_footer
      %s23 = sadd.s32 1, %s19
    $region7: #{tpu_custom_call.1} parent=1 // loop_footer_branch
      %18 = sbr.rel target = $region3
    $region8: #{tpu_custom_call.1} parent=1 // loop_exit
      _
    %473 = vsyncpa [#allocation4], 1
    %s474 = scalar_lea.sflag [#allocation4], 1
    %475 = vsyncpa %s474, 1
    %476 = vsyncpa [#allocation7], 1
    %s477 = scalar_lea.sflag [#allocation7], 1
    %478 = vsyncpa %s477, 1
    %479 = vsyncpa [#allocation5], 1
    %s480 = scalar_lea.sflag [#allocation5], 1
    %481 = vsyncpa %s480, 1

</llo_original>
